<compile_context>
chip_gen: v7x
topology: tpu7x:2x2x1
jax: 0.10.0
libtpu: 0.0.40
codegen_flags: <defaults>
</compile_context>

<pallas_src>
import functools

import jax
import jax.numpy as jnp
from jax import lax
from jax.experimental import pallas as pl
from jax.experimental.pallas import tpu as pltpu


def _round_up(x, m):
    return ((x + m - 1) // m) * m


# ----------------------------- Pallas kernel --------------------------------
def _fast_prototype_kernel(
    ids_ref,      # (TM, 1)   int32  token ids for this row tile
    emb_enc_ref,  # (Vp, Hp)  bf16   embedding table pre-multiplied by encoder weight
    b_enc_ref,    # (1, Hp)   f32
    w_fus_ref,    # (Hp, Fp)  bf16   LinearFusion projection
    b_fus_ref,    # (1, Fp)   f32
    w_out_ref,    # (Fp, C)   bf16   OutputPoint head (narrow: C real output lanes)
    b_out_ref,    # (1, C)    f32
    out_ref,      # (TM, C)   f32    pointer logits (narrow store, no padding)
):
    tm = ids_ref.shape[0]
    vp = emb_enc_ref.shape[0]

    # --- Embedding lookup + encoder Linear fused: one-hot MXU matmul against the
    #     pre-multiplied table (exact for 0/1 one-hot).  Token ids >= Vp or < 0 would
    #     yield a bias-only row; vocab (100) < Vp (128) here so this cannot trigger.
    ids = ids_ref[...]                                                # (TM, 1) int32
    iota = lax.broadcasted_iota(jnp.int32, (tm, vp), 1)               # (TM, Vp)
    onehot = (ids == iota).astype(emb_enc_ref.dtype)                  # bf16 one-hot
    h = jnp.dot(onehot, emb_enc_ref[...],
                preferred_element_type=jnp.float32)                   # (TM, Hp) f32
    h = jnp.maximum(h + b_enc_ref[...], 0.0)                          # TextEncoder ReLU

    # --- LinearFusion: Linear + ReLU ---
    f = jnp.dot(h.astype(w_fus_ref.dtype), w_fus_ref[...],
                preferred_element_type=jnp.float32)
    f = jnp.maximum(f + b_fus_ref[...], 0.0)

    # --- OutputPoint: narrow pointer-logit head, (TM, C) store ---
    logits = jnp.dot(f.astype(w_out_ref.dtype), w_out_ref[...],
                     preferred_element_type=jnp.float32)
    out_ref[...] = logits + b_out_ref[...]


# ----------------------------- param packing ---------------------------------
def pack_params(params, lane=128):
    """Fold emb @ w_enc offline, zero-pad contraction dims to 128 lanes, bf16 weights."""
    emb, w_enc = params["emb"], params["w_enc"]
    V, D = emb.shape
    H = w_enc.shape[1]
    F = params["w_fus"].shape[1]
    C = params["w_out"].shape[1]
    Vp, Hp, Fp = (_round_up(v, lane) for v in (V, H, F))

    # Encoder linear folded into the embedding table (f32 matmul, then one bf16 cast).
    emb_enc = emb.astype(jnp.float32) @ w_enc.astype(jnp.float32)     # (V, H)

    def pad_w(a, r, c):
        z = jnp.zeros((r, c), jnp.bfloat16)
        return z.at[: a.shape[0], : a.shape[1]].set(a.astype(jnp.bfloat16))

    def pad_b(b, c):
        z = jnp.zeros((1, c), jnp.float32)
        return z.at[:, : b.shape[1]].set(b.astype(jnp.float32))

    return {
        "emb_enc": pad_w(emb_enc, Vp, Hp),
        "b_enc":   pad_b(params["b_enc"], Hp),
        "w_fus":   pad_w(params["w_fus"], Hp, Fp),
        "b_fus":   pad_b(params["b_fus"], Fp),
        "w_out":   pad_w(params["w_out"], Fp, C),    # narrow: keep C real columns
        "b_out":   pad_b(params["b_out"], C),
        "dims": dict(V=V, D=D, H=H, F=F, C=C, Vp=Vp, Hp=Hp, Fp=Fp),
    }


# ----------------------------- wrapper ---------------------------------------
@functools.partial(jax.jit, static_argnames=("tile_m",))
def _forward_impl(ids_pad, emb_enc, b_enc, w_fus, b_fus, w_out, b_out, tile_m):
    Vp, Hp = emb_enc.shape
    Fp = w_fus.shape[1]
    C = w_out.shape[1]
    Np = ids_pad.shape[0]
    TM = tile_m
    grid = (Np // TM,)

    # Resident weights/biases: constant index_map -> stay in VMEM across all row tiles.
    # TODO(synk): pipeline_mode=pl.Buffered(1) on the resident specs would reclaim their
    # second buffer; only matters when chasing max TM on v7x.
    res = lambda r, c: pl.BlockSpec((r, c), lambda i: (0, 0))

    grid_spec = pltpu.PrefetchScalarGridSpec(
        num_scalar_prefetch=0,
        grid=grid,
        in_specs=[
            pl.BlockSpec((TM, 1), lambda i: (i, 0)),   # token ids (row tile)
            res(Vp, Hp),                               # emb_enc
            res(1, Hp),                                # b_enc
            res(Hp, Fp),                               # w_fus
            res(1, Fp),                                # b_fus
            res(Fp, C),                                # w_out (narrow head)
            res(1, C),                                 # b_out
        ],
        out_specs=pl.BlockSpec((TM, C), lambda i: (i, 0)),   # narrow (TM, C) store
    )

    return pl.pallas_call(
        _fast_prototype_kernel,
        out_shape=jax.ShapeDtypeStruct((Np, C), jnp.float32),
        grid_spec=grid_spec,
        compiler_params=pltpu.CompilerParams(
            dimension_semantics=("parallel",),       # shard row tiles across TCs on v7x
            vmem_limit_bytes=48 * 1024 * 1024,       # headroom under v7x's 64 MiB physical
        ),
    )(ids_pad, emb_enc, b_enc, w_fus, b_fus, w_out, b_out)


def fast_prototype_forward(text_ids, mask, packed, tile_m=4096):
    """
    text_ids : (B, L) int32 token ids
    mask     : (B, L) float (1 = valid, 0 = pad)
    packed   : output of pack_params
    returns  : (B, L, C) float32 pointer logits (padded positions pushed to ~-1e9)
    """
    B, L = text_ids.shape
    C = packed["dims"]["C"]
    N = B * L

    # Row-tile size: 4096 at production scale (keep N >= 2*TM so v7x's two TensorCores
    # both get row tiles); shrink (8-aligned) for tiny inputs.
    TM = min(tile_m, _round_up(N, 8))
    Np = _round_up(N, TM)

    # Padded rows reuse token id 0; their logits are sliced off below.
    ids_pad = jnp.zeros((Np, 1), jnp.int32).at[:N, 0].set(text_ids.reshape(-1))

    logits_pad = _forward_impl(
        ids_pad,
        packed["emb_enc"], packed["b_enc"],
        packed["w_fus"], packed["b_fus"],
        packed["w_out"], packed["b_out"],
        TM,
    )
    logits = logits_pad[:N].reshape(B, L, C)
    # Additive pad mask applied on the narrow (B, L, C) logits in XLA (negligible cost).
    return logits + (mask[..., None].astype(jnp.float32) - 1.0) * 1e9


# ----------------------------- param init ------------------------------------
def init_params(key, vocab=100, d_model=32, d_hidden=32, d_fusion=32, n_types=2):
    c_out = 2 * n_types  # start/end pointer logits per entity type
    ks = jax.random.split(key, 4)
    scale = 0.02
    return {
        "emb":   (scale * jax.random.normal(ks[0], (vocab, d_model))).astype(jnp.float32),
        "w_enc": (scale * jax.random.normal(ks[1], (d_model, d_hidden))).astype(jnp.float32),
        "b_enc": jnp.zeros((1, d_hidden), jnp.float32),
        "w_fus": (scale * jax.random.normal(ks[2], (d_hidden, d_fusion))).astype(jnp.float32),
        "b_fus": jnp.zeros((1, d_fusion), jnp.float32),
        "w_out": (scale * jax.random.normal(ks[3], (d_fusion, c_out))).astype(jnp.float32),
        "b_out": jnp.zeros((1, c_out), jnp.float32),
    }


# ----------------------------- pure-JAX reference ----------------------------
def reference_forward(text_ids, mask, params):
    x = jnp.take(params["emb"], text_ids.reshape(-1), axis=0)
    h = jnp.maximum(x @ params["w_enc"] + params["b_enc"], 0.0)
    f = jnp.maximum(h @ params["w_fus"] + params["b_fus"], 0.0)
    logits = f @ params["w_out"] + params["b_out"]
    B, L = text_ids.shape
    logits = logits.reshape(B, L, -1)
    return logits + (mask[..., None].astype(jnp.float32) - 1.0) * 1e9


# TODO(synk): FLAT / RelPosFusion (relative-position attention over char+word lattice) and
# OBIE CRF decoding have no clean single-kernel Pallas mapping here; this script realizes
# the FusionE.linear + LabelE.point configuration end to end.
# TODO(synk): for production vocabularies (>~1K) replace the one-hot embedding matmul with a
# per-tile DMA row gather (memory_space=pl.ANY + make_async_copy) to keep it O(TM*H).

if __name__ == "__main__":
    key = jax.random.PRNGKey(0)
    kp, kt = jax.random.split(key)

    B, L = 2, 8          # batch, max sequence length
    params = init_params(kp)
    packed = pack_params(params)

    text = jax.random.randint(kt, (B, L), 0, 100, dtype=jnp.int32)
    # last 3 tokens of the second example are padding
    mask = jnp.ones((B, L), jnp.float32).at[1, 5:].set(0.0)

    logits = fast_prototype_forward(text, mask, packed)
    jax.block_until_ready(logits)

    assert logits.shape == (B, L, 4)
    assert bool(jnp.all(logits[1, 5:] <= -1e8))  # padded positions masked out

    # correctness vs. f32 reference (bf16 matmul operands -> loose tolerance)
    ref = reference_forward(text, mask, params)
    valid = mask[..., None] > 0.5
    max_diff = jnp.max(jnp.where(valid, jnp.abs(logits - ref), 0.0))
    assert float(max_diff) < 1e-2, f"max diff {max_diff}"

    print("KERNEL_OK")
</pallas_src>

<mosaic_0001>
module attributes {stable_mosaic.version = 11 : i64} {
  func.func @_fast_prototype_kernel(%arg0: i32, %arg1: memref<16x1xi32, #tpu.memory_space<vmem>>, %arg2: memref<128x128xbf16, #tpu.memory_space<vmem>>, %arg3: memref<1x128xf32, #tpu.memory_space<vmem>>, %arg4: memref<128x128xbf16, #tpu.memory_space<vmem>>, %arg5: memref<1x128xf32, #tpu.memory_space<vmem>>, %arg6: memref<128x4xbf16, #tpu.memory_space<vmem>>, %arg7: memref<1x4xf32, #tpu.memory_space<vmem>>, %arg8: memref<16x4xf32, #tpu.memory_space<vmem>>) attributes {dimension_semantics = [#tpu.dimension_semantics<parallel>], iteration_bounds = array<i64: 1>, scalar_prefetch = 0 : i64, scratch_operands = 0 : i64, tpu.core_type = #tpu.core_type<tc>, window_params = [{transform_indices = @transform_0, window_bounds = array<i64: 16, 1>}, {pipeline_mode = #tpu.pipeline_mode<synchronous>, transform_indices = @transform_1, window_bounds = array<i64: 128, 128>}, {pipeline_mode = #tpu.pipeline_mode<synchronous>, transform_indices = @transform_2, window_bounds = array<i64: 1, 128>}, {pipeline_mode = #tpu.pipeline_mode<synchronous>, transform_indices = @transform_3, window_bounds = array<i64: 128, 128>}, {pipeline_mode = #tpu.pipeline_mode<synchronous>, transform_indices = @transform_4, window_bounds = array<i64: 1, 128>}, {pipeline_mode = #tpu.pipeline_mode<synchronous>, transform_indices = @transform_5, window_bounds = array<i64: 128, 4>}, {pipeline_mode = #tpu.pipeline_mode<synchronous>, transform_indices = @transform_6, window_bounds = array<i64: 1, 4>}, {transform_indices = @transform_7, window_bounds = array<i64: 16, 4>}]} {
    %c0 = arith.constant 0 : index
    %c0_0 = arith.constant 0 : index
    %0 = vector.load %arg1[%c0, %c0_0] : memref<16x1xi32, #tpu.memory_space<vmem>>, vector<16x1xi32>
    %1 = tpu.iota {dimensions = array<i32: 1>} : vector<16x128xi32>
    %2 = vector.broadcast %0 : vector<16x1xi32> to vector<16x128xi32>
    %3 = arith.cmpi eq, %2, %1 : vector<16x128xi32>
    %4 = arith.extui %3 : vector<16x128xi1> to vector<16x128xi32>
    %5 = arith.sitofp %4 : vector<16x128xi32> to vector<16x128xf32>
    %6 = arith.truncf %5 : vector<16x128xf32> to vector<16x128xbf16>
    %c0_1 = arith.constant 0 : index
    %c0_2 = arith.constant 0 : index
    %7 = vector.load %arg2[%c0_1, %c0_2] : memref<128x128xbf16, #tpu.memory_space<vmem>>, vector<128x128xbf16>
    %cst = arith.constant dense<0.000000e+00> : vector<16x128xf32>
    %8 = tpu.matmul %6, %7, %cst {dimension_numbers = #tpu.dot_dimension_numbers<[1], [0], [0], [1], [0, 0, 1, 1], [], []>} : vector<16x128xbf16>, vector<128x128xbf16>, vector<16x128xf32> -> vector<16x128xf32>
    %c0_3 = arith.constant 0 : index
    %c0_4 = arith.constant 0 : index
    %9 = vector.load %arg3[%c0_3, %c0_4] : memref<1x128xf32, #tpu.memory_space<vmem>>, vector<1x128xf32>
    %10 = vector.broadcast %9 : vector<1x128xf32> to vector<16x128xf32>
    %11 = arith.addf %8, %10 : vector<16x128xf32>
    %cst_5 = arith.constant 0.000000e+00 : f32
    %12 = vector.broadcast %cst_5 : f32 to vector<16x128xf32>
    %13 = arith.maximumf %11, %12 : vector<16x128xf32>
    %14 = arith.truncf %13 : vector<16x128xf32> to vector<16x128xbf16>
    %c0_6 = arith.constant 0 : index
    %c0_7 = arith.constant 0 : index
    %15 = vector.load %arg4[%c0_6, %c0_7] : memref<128x128xbf16, #tpu.memory_space<vmem>>, vector<128x128xbf16>
    %cst_8 = arith.constant dense<0.000000e+00> : vector<16x128xf32>
    %16 = tpu.matmul %14, %15, %cst_8 {dimension_numbers = #tpu.dot_dimension_numbers<[1], [0], [0], [1], [0, 0, 1, 1], [], []>} : vector<16x128xbf16>, vector<128x128xbf16>, vector<16x128xf32> -> vector<16x128xf32>
    %c0_9 = arith.constant 0 : index
    %c0_10 = arith.constant 0 : index
    %17 = vector.load %arg5[%c0_9, %c0_10] : memref<1x128xf32, #tpu.memory_space<vmem>>, vector<1x128xf32>
    %18 = vector.broadcast %17 : vector<1x128xf32> to vector<16x128xf32>
    %19 = arith.addf %16, %18 : vector<16x128xf32>
    %cst_11 = arith.constant 0.000000e+00 : f32
    %20 = vector.broadcast %cst_11 : f32 to vector<16x128xf32>
    %21 = arith.maximumf %19, %20 : vector<16x128xf32>
    %22 = arith.truncf %21 : vector<16x128xf32> to vector<16x128xbf16>
    %c0_12 = arith.constant 0 : index
    %c0_13 = arith.constant 0 : index
    %23 = vector.load %arg6[%c0_12, %c0_13] : memref<128x4xbf16, #tpu.memory_space<vmem>>, vector<128x4xbf16>
    %cst_14 = arith.constant dense<0.000000e+00> : vector<16x4xf32>
    %24 = tpu.matmul %22, %23, %cst_14 {dimension_numbers = #tpu.dot_dimension_numbers<[1], [0], [0], [1], [0, 0, 1, 1], [], []>} : vector<16x128xbf16>, vector<128x4xbf16>, vector<16x4xf32> -> vector<16x4xf32>
    %c0_15 = arith.constant 0 : index
    %c0_16 = arith.constant 0 : index
    %25 = vector.load %arg7[%c0_15, %c0_16] : memref<1x4xf32, #tpu.memory_space<vmem>>, vector<1x4xf32>
    %26 = vector.broadcast %25 : vector<1x4xf32> to vector<16x4xf32>
    %27 = arith.addf %24, %26 : vector<16x4xf32>
    %c0_17 = arith.constant 0 : index
    %c0_18 = arith.constant 0 : index
    %28 = vector.load %arg8[%c0_17, %c0_18] : memref<16x4xf32, #tpu.memory_space<vmem>>, vector<16x4xf32>
    tpu.vector_store %arg8[%c0_17, %c0_18], %27 {strides = array<i32>} : memref<16x4xf32, #tpu.memory_space<vmem>>, vector<16x4xf32>,
    return
  }
  func.func @transform_0(%arg0: i32) -> (i32, i32) {
    %c0_i32 = arith.constant 0 : i32
    %c0_i32_0 = arith.constant 0 : i32
    return %arg0, %c0_i32 : i32, i32
  }
  func.func @transform_1(%arg0: i32) -> (i32, i32) {
    %c0_i32 = arith.constant 0 : i32
    %c0_i32_0 = arith.constant 0 : i32
    %c0_i32_1 = arith.constant 0 : i32
    return %c0_i32, %c0_i32_0 : i32, i32
  }
  func.func @transform_2(%arg0: i32) -> (i32, i32) {
    %c0_i32 = arith.constant 0 : i32
    %c0_i32_0 = arith.constant 0 : i32
    %c0_i32_1 = arith.constant 0 : i32
    return %c0_i32, %c0_i32_0 : i32, i32
  }
  func.func @transform_3(%arg0: i32) -> (i32, i32) {
    %c0_i32 = arith.constant 0 : i32
    %c0_i32_0 = arith.constant 0 : i32
    %c0_i32_1 = arith.constant 0 : i32
    return %c0_i32, %c0_i32_0 : i32, i32
  }
  func.func @transform_4(%arg0: i32) -> (i32, i32) {
    %c0_i32 = arith.constant 0 : i32
    %c0_i32_0 = arith.constant 0 : i32
    %c0_i32_1 = arith.constant 0 : i32
    return %c0_i32, %c0_i32_0 : i32, i32
  }
  func.func @transform_5(%arg0: i32) -> (i32, i32) {
    %c0_i32 = arith.constant 0 : i32
    %c0_i32_0 = arith.constant 0 : i32
    %c0_i32_1 = arith.constant 0 : i32
    return %c0_i32, %c0_i32_0 : i32, i32
  }
  func.func @transform_6(%arg0: i32) -> (i32, i32) {
    %c0_i32 = arith.constant 0 : i32
    %c0_i32_0 = arith.constant 0 : i32
    %c0_i32_1 = arith.constant 0 : i32
    return %c0_i32, %c0_i32_0 : i32, i32
  }
  func.func @transform_7(%arg0: i32) -> (i32, i32) {
    %c0_i32 = arith.constant 0 : i32
    %c0_i32_0 = arith.constant 0 : i32
    return %arg0, %c0_i32 : i32, i32
  }
}

</mosaic_0001>

<llo_original>
// kernel: _forward_impl.1
$region0: #{_forward_impl.1}
  #allocation0 [shape = 'u32[]', space=smem, size = 0x4, offset = 0x4, fixed_abs, tag = 'smem constant byte address 0x4 - core index']
  #allocation1 [shape = 'u32[144,128]{1,0:T(1,128)}', space=vmem, size = 0x12000, scoped, tag = 'internal scratch']
  %s0 = inlined_call_operand.vmem [shape: s32[16,1], index: 0, kind: input, shape index: {}]
  %s1 = inlined_call_operand.vmem [shape: bf16[128,128], index: 1, kind: input, shape index: {}]
  %s2 = inlined_call_operand.vmem [shape: f32[1,128], index: 2, kind: input, shape index: {}]
  %s3 = inlined_call_operand.hbm [shape: bf16[128,128], index: 3, kind: input, shape index: {}]
  %s4 = inlined_call_operand.vmem [shape: f32[1,128], index: 4, kind: input, shape index: {}]
  %s5 = inlined_call_operand.vmem [shape: bf16[128,4], index: 5, kind: input, shape index: {}]
  %s6 = inlined_call_operand.vmem [shape: f32[1,4], index: 6, kind: input, shape index: {}]
  %s7 = inlined_call_operand.vmem [shape: f32[16,4], index: 7, kind: output, shape index: {}]
  %s8 = sld [smem:[#allocation0]]
  $region42: #{_forward_impl.1} parent=0
    _
  %s10 = ssub.s32 1, %s8
  %s11 = scalar_select 0, %s10, %s8
  $region1: #{_forward_impl.1} parent=0
    #allocation2 [shape = 'u8[32768]{0}', space=vmem, size = 0x8000, scoped, tag = 'input window, operand 3, single buffered']
    #allocation3 [shape = 's32[1]{0}', space=sflag, size = 0x4, scoped, tag = 'scoped memory for _forward_impl.1']
    %12 = vsyncpa [#allocation3], 0
    // Predicated region
    $region2: #{_forward_impl.1} parent=1 // pred_check
      _
    $region3: #{_forward_impl.1} parent=1 // pred_check_branch
      %14 = sbr.rel (0) target = $region5
    $region4: #{_forward_impl.1} parent=1 // pred_region
      _
    $region5: #{_forward_impl.1} parent=1 // pred_fallthru
      _
    // Predicated region
    $region6: #{_forward_impl.1} parent=1 // pred_check
      _
    $region7: #{_forward_impl.1} parent=1 // pred_check_branch
      %16 = sbr.rel (0) target = $region9
    $region8: #{_forward_impl.1} parent=1 // pred_region
      _
    $region9: #{_forward_impl.1} parent=1 // pred_fallthru
      _
    // Predicated region
    $region10: #{_forward_impl.1} parent=1 // pred_check
      _
    $region11: #{_forward_impl.1} parent=1 // pred_check_branch
      %18 = sbr.rel (0) target = $region13
    $region12: #{_forward_impl.1} parent=1 // pred_region
      _
    $region13: #{_forward_impl.1} parent=1 // pred_fallthru
      _
    // Predicated region
    $region14: #{_forward_impl.1} parent=1 // pred_check
      _
    $region15: #{_forward_impl.1} parent=1 // pred_check_branch
      %20 = sbr.rel (0) target = $region17
    $region16: #{_forward_impl.1} parent=1 // pred_region
      %s22 = ssub.s32 1024, 1024
      %23 = vsyncadd [#allocation3], %s22
      %s24 = sshll.u32 [#allocation2], 4
      %s25 = int_to_ptr.vmem [resolvable:$true] %s24
      %30 = dma.hbm_to_vmem [thread:$0]  %s3, 1024, %s25, [#allocation3], 64, 64, 4
    $region17: #{_forward_impl.1} parent=1 // pred_fallthru
      _
    // Predicated region
    $region18: #{_forward_impl.1} parent=1 // pred_check
      _
    $region19: #{_forward_impl.1} parent=1 // pred_check_branch
      %32 = sbr.rel (0) target = $region21
    $region20: #{_forward_impl.1} parent=1 // pred_region
      _
    $region21: #{_forward_impl.1} parent=1 // pred_fallthru
      _
    // Predicated region
    $region22: #{_forward_impl.1} parent=1 // pred_check
      _
    $region23: #{_forward_impl.1} parent=1 // pred_check_branch
      %34 = sbr.rel (0) target = $region25
    $region24: #{_forward_impl.1} parent=1 // pred_region
      _
    $region25: #{_forward_impl.1} parent=1 // pred_fallthru
      _
    // Predicated region
    $region26: #{_forward_impl.1} parent=1 // pred_check
      _
    $region27: #{_forward_impl.1} parent=1 // pred_check_branch
      %36 = sbr.rel (0) target = $region29
    $region28: #{_forward_impl.1} parent=1 // pred_region
      _
    $region29: #{_forward_impl.1} parent=1 // pred_fallthru
      _
    // Predicated region
    $region30: #{_forward_impl.1} parent=1 // pred_check
      _
    $region31: #{_forward_impl.1} parent=1 // pred_check_branch
      %38 = sbr.rel (0) target = $region33
    $region32: #{_forward_impl.1} parent=1 // pred_region
      %39 = dma.done [#allocation3], 1024
    $region33: #{_forward_impl.1} parent=1 // pred_fallthru
      _
    %v41 = vld [vmem:[%s0] sm:$0xff]
    %v42 = vld [vmem:[%s0 + $0x8] sm:$0xff]
    %v43 = vlaneseq
    %v44 = vand.u32 %v43, 127
    %45 = vset.pattern.permute.xlu0 0
    %46 = vperm.xlu0 %45, %v41
    %v47 = vpop.permute.xlu0 %46
    %48 = vset.pattern.permute.xlu0 0
    %49 = vperm.xlu0 %48, %v42
    %v50 = vpop.permute.xlu0 %49
    %vm51 = vcmp.eq.s32.totalorder %v47, %v44
    %vm52 = vcmp.eq.s32.totalorder %v50, %v44
    %v53 = vsel %vm51, 1, 0
    %v54 = vsel %vm52, 1, 0
    %v55 = vcvt.s32.f32 %v53
    %v56 = vcvt.s32.f32 %v54
    %v57 = vpack.c.bf16 %v56, %v55
    %v58 = vld [vmem:[%s1] sm:$0xf]
    %v59 = vld [vmem:[%s1 + $0x4] sm:$0xf]
    %v60 = vld [vmem:[%s1 + $0x8] sm:$0xf]
    %v61 = vld [vmem:[%s1 + $0xc] sm:$0xf]
    %v62 = vld [vmem:[%s1 + $0x10] sm:$0xf]
    %v63 = vld [vmem:[%s1 + $0x14] sm:$0xf]
    %v64 = vld [vmem:[%s1 + $0x18] sm:$0xf]
    %v65 = vld [vmem:[%s1 + $0x1c] sm:$0xf]
    %v66 = vld [vmem:[%s1 + $0x20] sm:$0xf]
    %v67 = vld [vmem:[%s1 + $0x24] sm:$0xf]
    %v68 = vld [vmem:[%s1 + $0x28] sm:$0xf]
    %v69 = vld [vmem:[%s1 + $0x2c] sm:$0xf]
    %v70 = vld [vmem:[%s1 + $0x30] sm:$0xf]
    %v71 = vld [vmem:[%s1 + $0x34] sm:$0xf]
    %v72 = vld [vmem:[%s1 + $0x38] sm:$0xf]
    %v73 = vld [vmem:[%s1 + $0x3c] sm:$0xf]
    %v74 = vld [vmem:[%s2] sm:$0x1]
    %v76 = vlaneseq
    %v77 = vshrl.u32 %v76, 7
    %v78 = vsub.s32 0, %v77
    %v79 = vrot.slane %v74, %v78
    %v97 = vunpack.c.l.b16 %v58
    %v98 = vunpack.c.l.b16 %v59
    %v99 = vunpack.c.l.b16 %v60
    %v100 = vunpack.c.l.b16 %v61
    %v101 = vunpack.c.l.b16 %v62
    %v102 = vunpack.c.l.b16 %v63
    %v103 = vunpack.c.l.b16 %v64
    %v104 = vunpack.c.l.b16 %v65
    %v105 = vunpack.c.l.b16 %v66
    %v106 = vunpack.c.l.b16 %v67
    %v107 = vunpack.c.l.b16 %v68
    %v108 = vunpack.c.l.b16 %v69
    %v109 = vunpack.c.l.b16 %v70
    %v110 = vunpack.c.l.b16 %v71
    %v111 = vunpack.c.l.b16 %v72
    %v112 = vunpack.c.l.b16 %v73
    %v113 = vpack.c.b16 %v98, %v97
    %v114 = vpack.c.b16 %v100, %v99
    %v115 = vpack.c.b16 %v102, %v101
    %v116 = vpack.c.b16 %v104, %v103
    %v117 = vpack.c.b16 %v106, %v105
    %v118 = vpack.c.b16 %v108, %v107
    %v119 = vpack.c.b16 %v110, %v109
    %v120 = vpack.c.b16 %v112, %v111
    %129 = vmatprep.subr.bf16.mxu0 0
    %130 = vmatpush1.bf16.msra.mxu0 %v113
    %131 = vmatprep.subr.bf16.mxu0 0
    %132 = vmatpush1.bf16.msra.mxu0 %v114
    %133 = vmatprep.subr.bf16.mxu0 0
    %134 = vmatpush1.bf16.msra.mxu0 %v115
    %135 = vmatprep.subr.bf16.mxu0 0
    %136 = vmatpush1.bf16.msra.mxu0 %v116
    %137 = vmatprep.subr.bf16.mxu0 0
    %138 = vmatpush1.bf16.msra.mxu0 %v117
    %139 = vmatprep.subr.bf16.mxu0 0
    %140 = vmatpush1.bf16.msra.mxu0 %v118
    %141 = vmatprep.subr.bf16.mxu0 0
    %142 = vmatpush1.bf16.msra.mxu0 %v119
    %143 = vmatprep.subr.bf16.mxu0 0
    %144 = vmatpush1.bf16.msra.mxu0 %v120
    %145 = vmatprep.subr.bf16.mxu0 0
    %146 = vmatpush1.bf16.msra.mxu0 0
    %147 = vmatprep.subr.bf16.mxu0 0
    %148 = vmatpush1.bf16.msra.mxu0 0
    %149 = vmatprep.subr.bf16.mxu0 0
    %150 = vmatpush1.bf16.msra.mxu0 0
    %151 = vmatprep.subr.bf16.mxu0 0
    %152 = vmatpush1.bf16.msra.mxu0 0
    %153 = vmatprep.subr.bf16.mxu0 0
    %154 = vmatpush1.bf16.msra.mxu0 0
    %155 = vmatprep.subr.bf16.mxu0 0
    %156 = vmatpush1.bf16.msra.mxu0 0
    %157 = vmatprep.subr.bf16.mxu0 0
    %158 = vmatpush1.bf16.msra.mxu0 0
    %159 = vmatprep.subr.bf16.mxu0 0
    %160 = vmatpush1.bf16.msra.mxu0 0
    %161 = vmatprep.mubr.bf16.mxu0 0
    %162 = vmatmul.mubr.bf16.gmra.mrb[0].mxu0 %v57
    %v163 = vpop.f32.mrb[0].mxu0
    %v164 = vadd.f32 %v79, %v163
    %v165 = vpop.f32.mrb[0].mxu0
    %v166 = vpop.f32.mrb[0].mxu0
    %v167 = vadd.f32 %v79, %v166
    %v168 = vpop.f32.mrb[0].mxu0
    %169 = vdwg.mxu0
    %v170 = vmax.f32 %v164, 0.0
    %v171 = vmax.f32 %v167, 0.0
    %v172 = vpack.c.bf16 %v171, %v170
    %v173 = vld [vmem:[#allocation2] sm:$0xf]
    %v174 = vld [vmem:[#allocation2 + $0x4] sm:$0xf]
    %v175 = vld [vmem:[#allocation2 + $0x8] sm:$0xf]
    %v176 = vld [vmem:[#allocation2 + $0xc] sm:$0xf]
    %v177 = vld [vmem:[#allocation2 + $0x10] sm:$0xf]
    %v178 = vld [vmem:[#allocation2 + $0x14] sm:$0xf]
    %v179 = vld [vmem:[#allocation2 + $0x18] sm:$0xf]
    %v180 = vld [vmem:[#allocation2 + $0x1c] sm:$0xf]
    %v181 = vld [vmem:[#allocation2 + $0x20] sm:$0xf]
    %v182 = vld [vmem:[#allocation2 + $0x24] sm:$0xf]
    %v183 = vld [vmem:[#allocation2 + $0x28] sm:$0xf]
    %v184 = vld [vmem:[#allocation2 + $0x2c] sm:$0xf]
    %v185 = vld [vmem:[#allocation2 + $0x30] sm:$0xf]
    %v186 = vld [vmem:[#allocation2 + $0x34] sm:$0xf]
    %v187 = vld [vmem:[#allocation2 + $0x38] sm:$0xf]
    %v188 = vld [vmem:[#allocation2 + $0x3c] sm:$0xf]
    %v189 = vld [vmem:[%s4] sm:$0x1]
    %v191 = vlaneseq
    %v192 = vshrl.u32 %v191, 7
    %v193 = vsub.s32 0, %v192
    %v194 = vrot.slane %v189, %v193
    %v212 = vunpack.c.l.b16 %v173
    %v213 = vunpack.c.l.b16 %v174
    %v214 = vunpack.c.l.b16 %v175
    %v215 = vunpack.c.l.b16 %v176
    %v216 = vunpack.c.l.b16 %v177
    %v217 = vunpack.c.l.b16 %v178
    %v218 = vunpack.c.l.b16 %v179
    %v219 = vunpack.c.l.b16 %v180
    %v220 = vunpack.c.l.b16 %v181
    %v221 = vunpack.c.l.b16 %v182
    %v222 = vunpack.c.l.b16 %v183
    %v223 = vunpack.c.l.b16 %v184
    %v224 = vunpack.c.l.b16 %v185
    %v225 = vunpack.c.l.b16 %v186
    %v226 = vunpack.c.l.b16 %v187
    %v227 = vunpack.c.l.b16 %v188
    %v228 = vpack.c.b16 %v213, %v212
    %v229 = vpack.c.b16 %v215, %v214
    %v230 = vpack.c.b16 %v217, %v216
    %v231 = vpack.c.b16 %v219, %v218
    %v232 = vpack.c.b16 %v221, %v220
    %v233 = vpack.c.b16 %v223, %v222
    %v234 = vpack.c.b16 %v225, %v224
    %v235 = vpack.c.b16 %v227, %v226
    %244 = vmatprep.subr.bf16.mxu0 0
    %245 = vmatpush1.bf16.msra.mxu0 %v228
    %246 = vmatprep.subr.bf16.mxu0 0
    %247 = vmatpush1.bf16.msra.mxu0 %v229
    %248 = vmatprep.subr.bf16.mxu0 0
    %249 = vmatpush1.bf16.msra.mxu0 %v230
    %250 = vmatprep.subr.bf16.mxu0 0
    %251 = vmatpush1.bf16.msra.mxu0 %v231
    %252 = vmatprep.subr.bf16.mxu0 0
    %253 = vmatpush1.bf16.msra.mxu0 %v232
    %254 = vmatprep.subr.bf16.mxu0 0
    %255 = vmatpush1.bf16.msra.mxu0 %v233
    %256 = vmatprep.subr.bf16.mxu0 0
    %257 = vmatpush1.bf16.msra.mxu0 %v234
    %258 = vmatprep.subr.bf16.mxu0 0
    %259 = vmatpush1.bf16.msra.mxu0 %v235
    %260 = vmatprep.subr.bf16.mxu0 0
    %261 = vmatpush1.bf16.msra.mxu0 0
    %262 = vmatprep.subr.bf16.mxu0 0
    %263 = vmatpush1.bf16.msra.mxu0 0
    %264 = vmatprep.subr.bf16.mxu0 0
    %265 = vmatpush1.bf16.msra.mxu0 0
    %266 = vmatprep.subr.bf16.mxu0 0
    %267 = vmatpush1.bf16.msra.mxu0 0
    %268 = vmatprep.subr.bf16.mxu0 0
    %269 = vmatpush1.bf16.msra.mxu0 0
    %270 = vmatprep.subr.bf16.mxu0 0
    %271 = vmatpush1.bf16.msra.mxu0 0
    %272 = vmatprep.subr.bf16.mxu0 0
    %273 = vmatpush1.bf16.msra.mxu0 0
    %274 = vmatprep.subr.bf16.mxu0 0
    %275 = vmatpush1.bf16.msra.mxu0 0
    %276 = vmatprep.mubr.bf16.mxu0 0
    %277 = vmatmul.mubr.bf16.gmra.mrb[0].mxu0 %v172
    %v278 = vpop.f32.mrb[0].mxu0
    %v279 = vadd.f32 %v194, %v278
    %v280 = vpop.f32.mrb[0].mxu0
    %v281 = vpop.f32.mrb[0].mxu0
    %v282 = vadd.f32 %v194, %v281
    %v283 = vpop.f32.mrb[0].mxu0
    %284 = vdwg.mxu0
    %v285 = vmax.f32 %v279, 0.0
    %v286 = vmax.f32 %v282, 0.0
    %v287 = vpack.c.bf16 %v286, %v285
    %v288 = vld [vmem:[%s5] sm:$0xf]
    %v289 = vld [vmem:[%s5 + $0x4] sm:$0xf]
    %v290 = vld [vmem:[%s5 + $0x8] sm:$0xf]
    %v291 = vld [vmem:[%s5 + $0xc] sm:$0xf]
    %v292 = vld [vmem:[%s5 + $0x10] sm:$0xf]
    %v293 = vld [vmem:[%s5 + $0x14] sm:$0xf]
    %v294 = vld [vmem:[%s5 + $0x18] sm:$0xf]
    %v295 = vld [vmem:[%s5 + $0x1c] sm:$0xf]
    %v296 = vld [vmem:[%s5 + $0x20] sm:$0xf]
    %v297 = vld [vmem:[%s5 + $0x24] sm:$0xf]
    %v298 = vld [vmem:[%s5 + $0x28] sm:$0xf]
    %v299 = vld [vmem:[%s5 + $0x2c] sm:$0xf]
    %v300 = vld [vmem:[%s5 + $0x30] sm:$0xf]
    %v301 = vld [vmem:[%s5 + $0x34] sm:$0xf]
    %v302 = vld [vmem:[%s5 + $0x38] sm:$0xf]
    %v303 = vld [vmem:[%s5 + $0x3c] sm:$0xf]
    %v304 = vld [vmem:[%s6] sm:$0x1]
    %v306 = vlaneseq
    %v307 = vshrl.u32 %v306, 7
    %v308 = vsub.s32 0, %v307
    %v309 = vrot.slane %v304, %v308
    %v327 = vunpack.c.l.b16 %v288
    %v328 = vunpack.c.l.b16 %v289
    %v329 = vunpack.c.l.b16 %v290
    %v330 = vunpack.c.l.b16 %v291
    %v331 = vunpack.c.l.b16 %v292
    %v332 = vunpack.c.l.b16 %v293
    %v333 = vunpack.c.l.b16 %v294
    %v334 = vunpack.c.l.b16 %v295
    %v335 = vunpack.c.l.b16 %v296
    %v336 = vunpack.c.l.b16 %v297
    %v337 = vunpack.c.l.b16 %v298
    %v338 = vunpack.c.l.b16 %v299
    %v339 = vunpack.c.l.b16 %v300
    %v340 = vunpack.c.l.b16 %v301
    %v341 = vunpack.c.l.b16 %v302
    %v342 = vunpack.c.l.b16 %v303
    %v343 = vpack.c.b16 %v328, %v327
    %v344 = vpack.c.b16 %v330, %v329
    %v345 = vpack.c.b16 %v332, %v331
    %v346 = vpack.c.b16 %v334, %v333
    %v347 = vpack.c.b16 %v336, %v335
    %v348 = vpack.c.b16 %v338, %v337
    %v349 = vpack.c.b16 %v340, %v339
    %v350 = vpack.c.b16 %v342, %v341
    %359 = vmatprep.subr.bf16.mxu0 0
    %360 = vmatpush1.bf16.msra.mxu0 %v343
    %361 = vmatprep.subr.bf16.mxu0 0
    %362 = vmatpush1.bf16.msra.mxu0 %v344
    %363 = vmatprep.subr.bf16.mxu0 0
    %364 = vmatpush1.bf16.msra.mxu0 %v345
    %365 = vmatprep.subr.bf16.mxu0 0
    %366 = vmatpush1.bf16.msra.mxu0 %v346
    %367 = vmatprep.subr.bf16.mxu0 0
    %368 = vmatpush1.bf16.msra.mxu0 %v347
    %369 = vmatprep.subr.bf16.mxu0 0
    %370 = vmatpush1.bf16.msra.mxu0 %v348
    %371 = vmatprep.subr.bf16.mxu0 0
    %372 = vmatpush1.bf16.msra.mxu0 %v349
    %373 = vmatprep.subr.bf16.mxu0 0
    %374 = vmatpush1.bf16.msra.mxu0 %v350
    %375 = vmatprep.subr.bf16.mxu0 0
    %376 = vmatpush1.bf16.msra.mxu0 0
    %377 = vmatprep.subr.bf16.mxu0 0
    %378 = vmatpush1.bf16.msra.mxu0 0
    %379 = vmatprep.subr.bf16.mxu0 0
    %380 = vmatpush1.bf16.msra.mxu0 0
    %381 = vmatprep.subr.bf16.mxu0 0
    %382 = vmatpush1.bf16.msra.mxu0 0
    %383 = vmatprep.subr.bf16.mxu0 0
    %384 = vmatpush1.bf16.msra.mxu0 0
    %385 = vmatprep.subr.bf16.mxu0 0
    %386 = vmatpush1.bf16.msra.mxu0 0
    %387 = vmatprep.subr.bf16.mxu0 0
    %388 = vmatpush1.bf16.msra.mxu0 0
    %389 = vmatprep.subr.bf16.mxu0 0
    %390 = vmatpush1.bf16.msra.mxu0 0
    %391 = vmatprep.mubr.bf16.mxu0 0
    %392 = vmatmul.mubr.bf16.gmra.mrb[0].mxu0 %v287
    %v393 = vpop.f32.mrb[0].mxu0
    %v394 = vadd.f32 %v309, %v393
    %v395 = vpop.f32.mrb[0].mxu0
    %v396 = vpop.f32.mrb[0].mxu0
    %v397 = vadd.f32 %v309, %v396
    %v398 = vpop.f32.mrb[0].mxu0
    %399 = vdwg.mxu0
    %vm400 = vcmask 31744
    %401 = vst.msk [vmem:[%s7] sm:$0xff] %vm400, %v394
    %402 = vst.msk [vmem:[%s7 + $0x8] sm:$0xff] %vm400, %v397
    // Predicated region
    $region34: #{_forward_impl.1} parent=1 // pred_check
      _
    $region35: #{_forward_impl.1} parent=1 // pred_check_branch
      %404 = sbr.rel (0) target = $region37
    $region36: #{_forward_impl.1} parent=1 // pred_region
      _
    $region37: #{_forward_impl.1} parent=1 // pred_fallthru
      _
    // Predicated region
    $region38: #{_forward_impl.1} parent=1 // pred_check
      _
    $region39: #{_forward_impl.1} parent=1 // pred_check_branch
      %406 = sbr.rel (0) target = $region41
    $region40: #{_forward_impl.1} parent=1 // pred_region
      _
    $region41: #{_forward_impl.1} parent=1 // pred_fallthru
      _
    %407 = vsyncpa [#allocation3], 1

</llo_original>
